<compile_context>
chip_gen: v5e
topology: v5e:2x2
jax: 0.10.0
libtpu: 0.0.40
codegen_flags: <defaults>
</compile_context>

<pallas_src>
import functools

import jax
import jax.numpy as jnp
from jax import lax
from jax.experimental import pallas as pl
from jax.experimental.pallas import tpu as pltpu


def _vmem_capacity_bytes():
    try:
        return int(pltpu.get_tpu_info().vmem_capacity_bytes)
    except Exception:
        return 64 * 1024 * 1024  # conservative (v7x-sized) fallback


def _pick_spatial_block(S, C, in_itemsize, vmem_cap):
    """Largest lane (spatial) block whose double-buffered working set fits the VMEM budget."""
    budget = max(vmem_cap // 4, 1 << 20)
    per_lane_bytes = 2 * (C * in_itemsize + 4) + 8  # 2 pipeline bufs of (logits + targets) + slack
    sb = int(budget // per_lane_bytes)
    if sb >= S or S <= 128:
        return S                            # single full-extent block (always layout-legal)
    return max(128, (sb // 128) * 128)      # lane-aligned block; tail masked in-kernel


def _focal_terms(x, t, w_vec, valid, gamma):
    """Per-spatial-position focal*ce and weights for one tile.

    x: (C, sb) f32 logits, t: (1, sb) i32 targets, w_vec: (C, 1) f32 or None,
    valid: (1, sb) bool.  Returns (fl_ce, w), both (1, sb) f32, zeroed where invalid.
    """
    C, sb = x.shape
    m = jnp.max(x, axis=0, keepdims=True)                            # (1, sb)
    xs = x - m
    sum_exp = jnp.sum(jnp.exp(xs), axis=0, keepdims=True)            # (1, sb)
    lse = jnp.log(sum_exp)
    cls = lax.broadcasted_iota(jnp.int32, (C, sb), 0)
    onehot = cls == t                                                # (C, sb)
    x_t = jnp.sum(jnp.where(onehot, xs, 0.0), axis=0, keepdims=True)
    ce = lse - x_t                                                   # -log_softmax(x)[target]
    pt = jnp.exp(-ce)

    if w_vec is None:
        w = jnp.where(valid, 1.0, 0.0).astype(jnp.float32)
    else:
        w = jnp.sum(jnp.where(onehot, w_vec, 0.0), axis=0, keepdims=True)
        w = jnp.where(valid, w, 0.0)

    g = float(gamma)
    if g == int(g) and g >= 0.0:
        foc = (1.0 - pt) ** int(g)           # integer_pow: VPU only, robust near pt == 1
    else:
        foc = jnp.power(jnp.maximum(1.0 - pt, 0.0), jnp.float32(g))

    fl_ce = jnp.where(valid, w * foc * ce, 0.0)
    return fl_ce, w


def _focal_partial_kernel(*refs, gamma, S, sb, has_weight):
    """Each grid block writes lane-dense (8,128) partial sums of focal*ce (and of weights)."""
    if has_weight:
        x_ref, t_ref, w_ref, num_ref, den_ref = refs
    else:
        x_ref, t_ref, num_ref = refs
        w_ref = den_ref = None

    j = pl.program_id(1)
    x = x_ref[...].astype(jnp.float32)           # (C, sb)
    t = t_ref[...]                               # (1, sb) int32
    lane = lax.broadcasted_iota(jnp.int32, (1, sb), 1)
    valid = (j * sb + lane) < S

    w_vec = w_ref[...].astype(jnp.float32) if has_weight else None
    fl_ce, w = _focal_terms(x, t, w_vec, valid, gamma)

    num_ref[...] = jnp.broadcast_to(jnp.sum(fl_ce), num_ref.shape)
    if has_weight:
        den_ref[...] = jnp.broadcast_to(jnp.sum(w), den_ref.shape)


def _focal_elem_kernel(*refs, gamma, S, sb, has_weight):
    """Per-spatial-position focal*ce (reduction='none'), lane-dense along the spatial axis."""
    if has_weight:
        x_ref, t_ref, w_ref, out_ref = refs
    else:
        x_ref, t_ref, out_ref = refs
        w_ref = None

    j = pl.program_id(1)
    x = x_ref[...].astype(jnp.float32)
    t = t_ref[...]
    lane = lax.broadcasted_iota(jnp.int32, (1, sb), 1)
    valid = (j * sb + lane) < S

    w_vec = w_ref[...].astype(jnp.float32) if has_weight else None
    fl_ce, _ = _focal_terms(x, t, w_vec, valid, gamma)
    out_ref[...] = fl_ce


def softmax_focal_loss(logits, target, *, gamma=2.0, weight=None, reduction="mean"):
    """Pallas implementation of SoftmaxFocalLoss.forward.

    logits: (N, C, *spatial), target: (N, *spatial) integer class ids,
    weight: optional (C,) per-class weights.
    """
    assert reduction in ("sum", "mean", "none")
    N, C = int(logits.shape[0]), int(logits.shape[1])
    spatial = tuple(int(d) for d in logits.shape[2:])
    S = 1
    for d in spatial:
        S *= d
    assert tuple(target.shape) == (N,) + spatial

    x = logits.reshape(N, C, S)                       # free reshape, native dtype stays in HBM
    t = target.reshape(N, 1, S).astype(jnp.int32)
    has_weight = weight is not None
    w = jnp.asarray(weight).reshape(C, 1) if has_weight else None

    vmem_cap = _vmem_capacity_bytes()
    sb = _pick_spatial_block(S, C, x.dtype.itemsize, vmem_cap)
    nsb = pl.cdiv(S, sb)
    grid = (N, nsb)

    in_specs = [
        pl.BlockSpec((None, C, sb), lambda n, j: (n, 0, j)),   # logits tile -> (C, sb)
        pl.BlockSpec((None, 1, sb), lambda n, j: (n, 0, j)),   # target tile -> (1, sb)
    ]
    inputs = [x, t]
    if has_weight:
        in_specs.append(pl.BlockSpec((C, 1), lambda n, j: (0, 0)))
        inputs.append(w)

    bytes_in = x.size * x.dtype.itemsize + t.size * 4 + (C * 4 if has_weight else 0)
    compiler_params = pltpu.CompilerParams(
        dimension_semantics=("parallel", "parallel"),   # no cross-iteration accumulator
        vmem_limit_bytes=int(vmem_cap // 2),
    )

    if reduction == "none":
        kernel = functools.partial(
            _focal_elem_kernel, gamma=float(gamma), S=S, sb=sb, has_weight=has_weight)
        out = pl.pallas_call(
            kernel,
            out_shape=jax.ShapeDtypeStruct((N, 1, S), jnp.float32),
            grid_spec=pltpu.PrefetchScalarGridSpec(
                num_scalar_prefetch=0,
                grid=grid,
                in_specs=in_specs,
                out_specs=pl.BlockSpec((None, 1, sb), lambda n, j: (n, 0, j)),
            ),
            compiler_params=compiler_params,
            cost_estimate=pl.CostEstimate(
                flops=8 * N * S * C,
                transcendentals=N * S * (C + 2),
                bytes_accessed=bytes_in + N * S * 4),
        )(*inputs)
        return out.reshape(N * S)

    # 'mean' / 'sum': every grid block emits its own lane-dense partial sums; reduce outside.
    kernel = functools.partial(
        _focal_partial_kernel, gamma=float(gamma), S=S, sb=sb, has_weight=has_weight)
    partial_sds = jax.ShapeDtypeStruct((N, nsb, 8, 128), jnp.float32)
    partial_spec = pl.BlockSpec((None, None, 8, 128), lambda n, j: (n, j, 0, 0))
    if has_weight:
        out_shape = (partial_sds, partial_sds)
        out_specs = (partial_spec, partial_spec)
    else:
        out_shape = partial_sds
        out_specs = partial_spec

    outs = pl.pallas_call(
        kernel,
        out_shape=out_shape,
        grid_spec=pltpu.PrefetchScalarGridSpec(
            num_scalar_prefetch=0,
            grid=grid,
            in_specs=in_specs,
            out_specs=out_specs,
        ),
        compiler_params=compiler_params,
        cost_estimate=pl.CostEstimate(
            flops=8 * N * S * C,
            transcendentals=N * S * (C + 2),
            bytes_accessed=bytes_in + N * nsb * 8 * 128 * 4 * (2 if has_weight else 1)),
    )(*inputs)

    if has_weight:
        num = jnp.sum(outs[0][:, :, 0, 0])
        den = jnp.sum(outs[1][:, :, 0, 0])
    else:
        num = jnp.sum(outs[:, :, 0, 0])
        den = jnp.float32(N * S)          # weights are all ones -> sum is the element count

    if reduction == "sum":
        return num
    return num / den


def _softmax_focal_loss_ref(logits, target, *, gamma=2.0, weight=None, reduction="mean"):
    """Pure-JAX reference mirroring the PyTorch module."""
    C = logits.shape[1]
    x = jnp.moveaxis(logits, 1, -1).reshape(-1, C).astype(jnp.float32)
    t = target.reshape(-1)
    logp = jax.nn.log_softmax(x, axis=-1)
    ce = -jnp.take_along_axis(logp, t[:, None], axis=-1)[:, 0]
    pt = jnp.exp(-ce)
    if weight is None:
        w = jnp.ones_like(ce)
    else:
        w = jnp.asarray(weight).astype(jnp.float32)[t]
    focal = w * (1.0 - pt) ** gamma
    if reduction == "mean":
        return jnp.sum(focal * ce) / jnp.sum(w)
    if reduction == "sum":
        return jnp.sum(focal * ce)
    return focal * ce


if __name__ == "__main__":
    key = jax.random.PRNGKey(0)
    k1, k2, k3 = jax.random.split(key, 3)

    # Small segmentation-style shapes: batch=2, classes=8, spatial 16x16.
    N, C, H, W = 2, 8, 16, 16
    logits = jax.random.normal(k1, (N, C, H, W), dtype=jnp.float32)
    target = jax.random.randint(k2, (N, H, W), 0, C, dtype=jnp.int32)
    class_weight = jax.random.uniform(k3, (C,), dtype=jnp.float32, minval=0.5, maxval=1.5)

    # Default module config: gamma=2.0, weight=None, reduction='mean'.
    loss = softmax_focal_loss(logits, target, gamma=2.0, weight=None, reduction="mean")
    loss = jax.block_until_ready(loss)
    ref = _softmax_focal_loss_ref(logits, target, gamma=2.0, weight=None, reduction="mean")
    assert jnp.allclose(loss, ref, rtol=1e-4, atol=1e-5), (loss, ref)

    # Class-weighted 'mean'.
    loss_w = softmax_focal_loss(logits, target, gamma=2.0, weight=class_weight, reduction="mean")
    ref_w = _softmax_focal_loss_ref(logits, target, gamma=2.0, weight=class_weight, reduction="mean")
    assert jnp.allclose(jax.block_until_ready(loss_w), ref_w, rtol=1e-4, atol=1e-5), (loss_w, ref_w)

    # 'sum'.
    loss_s = softmax_focal_loss(logits, target, gamma=2.0, weight=None, reduction="sum")
    ref_s = _softmax_focal_loss_ref(logits, target, gamma=2.0, weight=None, reduction="sum")
    assert jnp.allclose(jax.block_until_ready(loss_s), ref_s, rtol=1e-4, atol=1e-3), (loss_s, ref_s)

    # 'none' (per-element focal*ce).
    loss_n = softmax_focal_loss(logits, target, gamma=2.0, weight=None, reduction="none")
    ref_n = _softmax_focal_loss_ref(logits, target, gamma=2.0, weight=None, reduction="none")
    assert jnp.allclose(jax.block_until_ready(loss_n), ref_n, rtol=1e-3, atol=1e-5), "reduction='none' mismatch"

    print("KERNEL_OK")
</pallas_src>

<mosaic_0001>
module attributes {stable_mosaic.version = 11 : i64} {
  func.func @_focal_partial_kernel(%arg0: i32, %arg1: i32, %arg2: memref<1x8x256xf32, #tpu.memory_space<vmem>>, %arg3: memref<1x1x256xi32, #tpu.memory_space<vmem>>, %arg4: memref<1x1x8x128xf32, #tpu.memory_space<vmem>>) attributes {dimension_semantics = [#tpu.dimension_semantics<parallel>, #tpu.dimension_semantics<parallel>], iteration_bounds = array<i64: 2, 1>, scalar_prefetch = 0 : i64, scratch_operands = 0 : i64, tpu.core_type = #tpu.core_type<tc>, window_params = [{transform_indices = @transform_0, window_bounds = array<i64: 1, 8, 256>}, {transform_indices = @transform_1, window_bounds = array<i64: 1, 1, 256>}, {transform_indices = @transform_2, window_bounds = array<i64: 1, 1, 8, 128>}]} {
    %c0 = arith.constant 0 : index
    %c0_0 = arith.constant 0 : index
    %c0_1 = arith.constant 0 : index
    %0 = vector.load %arg2[%c0, %c0_0, %c0_1] : memref<1x8x256xf32, #tpu.memory_space<vmem>>, vector<1x8x256xf32>
    %1 = vector.shape_cast %0 : vector<1x8x256xf32> to vector<8x256xf32>
    %c0_2 = arith.constant 0 : index
    %c0_3 = arith.constant 0 : index
    %c0_4 = arith.constant 0 : index
    %2 = vector.load %arg3[%c0_2, %c0_3, %c0_4] : memref<1x1x256xi32, #tpu.memory_space<vmem>>, vector<1x1x256xi32>
    %3 = vector.shape_cast %2 : vector<1x1x256xi32> to vector<1x256xi32>
    %4 = tpu.iota {dimensions = array<i32: 1>} : vector<1x256xi32>
    %c256_i32 = arith.constant 256 : i32
    %5 = arith.muli %arg1, %c256_i32 : i32
    %6 = vector.broadcast %5 : i32 to vector<1x256xi32>
    %7 = arith.addi %6, %4 : vector<1x256xi32>
    %c256_i32_5 = arith.constant 256 : i32
    %8 = vector.broadcast %c256_i32_5 : i32 to vector<1x256xi32>
    %9 = arith.cmpi slt, %7, %8 : vector<1x256xi32>
    %cst = arith.constant dense<0xFF800000> : vector<256xf32>
    %10 = vector.multi_reduction <maximumf>, %1, %cst [0] : vector<8x256xf32> to vector<256xf32>
    %11 = vector.shape_cast %10 : vector<256xf32> to vector<1x256xf32>
    %12 = vector.broadcast %11 : vector<1x256xf32> to vector<8x256xf32>
    %13 = arith.subf %1, %12 : vector<8x256xf32>
    %14 = math.exp %13 : vector<8x256xf32>
    %cst_6 = arith.constant dense<0.000000e+00> : vector<256xf32>
    %15 = vector.multi_reduction <add>, %14, %cst_6 [0] : vector<8x256xf32> to vector<256xf32>
    %16 = vector.shape_cast %15 : vector<256xf32> to vector<1x256xf32>
    %17 = math.log %16 : vector<1x256xf32>
    %18 = tpu.iota {dimensions = array<i32: 0>} : vector<8x256xi32>
    %19 = vector.broadcast %3 : vector<1x256xi32> to vector<8x256xi32>
    %20 = arith.cmpi eq, %18, %19 : vector<8x256xi32>
    %cst_7 = arith.constant 0.000000e+00 : f32
    %21 = vector.broadcast %cst_7 : f32 to vector<8x256xf32>
    %22 = arith.select %20, %13, %21 : vector<8x256xi1>, vector<8x256xf32>
    %cst_8 = arith.constant dense<0.000000e+00> : vector<256xf32>
    %23 = vector.multi_reduction <add>, %22, %cst_8 [0] : vector<8x256xf32> to vector<256xf32>
    %24 = vector.shape_cast %23 : vector<256xf32> to vector<1x256xf32>
    %25 = arith.subf %17, %24 : vector<1x256xf32>
    %cst_9 = arith.constant 0.000000e+00 : f32
    %26 = vector.broadcast %cst_9 : f32 to vector<1x256xf32>
    %27 = arith.subf %26, %25 : vector<1x256xf32>
    %28 = math.exp %27 : vector<1x256xf32>
    %cst_10 = arith.constant 1.000000e+00 : f32
    %cst_11 = arith.constant 0.000000e+00 : f32
    %29 = vector.broadcast %cst_10 : f32 to vector<1x256xf32>
    %30 = vector.broadcast %cst_11 : f32 to vector<1x256xf32>
    %31 = arith.select %9, %29, %30 : vector<1x256xi1>, vector<1x256xf32>
    %cst_12 = arith.constant 1.000000e+00 : f32
    %32 = vector.broadcast %cst_12 : f32 to vector<1x256xf32>
    %33 = arith.subf %32, %28 : vector<1x256xf32>
    %34 = arith.mulf %33, %33 : vector<1x256xf32>
    %35 = arith.mulf %31, %34 : vector<1x256xf32>
    %36 = arith.mulf %35, %25 : vector<1x256xf32>
    %cst_13 = arith.constant 0.000000e+00 : f32
    %37 = vector.broadcast %cst_13 : f32 to vector<1x256xf32>
    %38 = arith.select %9, %36, %37 : vector<1x256xi1>, vector<1x256xf32>
    %39 = vector.shape_cast %38 : vector<1x256xf32> to vector<1x1x256xf32>
    %cst_14 = arith.constant dense<0.000000e+00> : vector<1xf32>
    %40 = vector.multi_reduction <add>, %39, %cst_14 [1, 2] : vector<1x1x256xf32> to vector<1xf32>
    %41 = vector.shape_cast %40 : vector<1xf32> to vector<1x1x1xf32>
    %42 = vector.extract %41[0, 0, 0] : f32 from vector<1x1x1xf32>
    %43 = vector.broadcast %42 : f32 to vector<8x128xf32>
    %c0_15 = arith.constant 0 : index
    %c0_16 = arith.constant 0 : index
    %c0_17 = arith.constant 0 : index
    %c0_18 = arith.constant 0 : index
    %44 = vector.load %arg4[%c0_15, %c0_16, %c0_17, %c0_18] : memref<1x1x8x128xf32, #tpu.memory_space<vmem>>, vector<1x1x8x128xf32>
    %45 = vector.shape_cast %44 : vector<1x1x8x128xf32> to vector<8x128xf32>
    %46 = vector.shape_cast %43 : vector<8x128xf32> to vector<1x1x8x128xf32>
    tpu.vector_store %arg4[%c0_15, %c0_16, %c0_17, %c0_18], %46 {strides = array<i32>} : memref<1x1x8x128xf32, #tpu.memory_space<vmem>>, vector<1x1x8x128xf32>,
    return
  }
  func.func @transform_0(%arg0: i32, %arg1: i32) -> (i32, i32, i32) {
    %c0_i32 = arith.constant 0 : i32
    %c0_i32_0 = arith.constant 0 : i32
    return %arg0, %c0_i32, %arg1 : i32, i32, i32
  }
  func.func @transform_1(%arg0: i32, %arg1: i32) -> (i32, i32, i32) {
    %c0_i32 = arith.constant 0 : i32
    %c0_i32_0 = arith.constant 0 : i32
    return %arg0, %c0_i32, %arg1 : i32, i32, i32
  }
  func.func @transform_2(%arg0: i32, %arg1: i32) -> (i32, i32, i32, i32) {
    %c0_i32 = arith.constant 0 : i32
    %c0_i32_0 = arith.constant 0 : i32
    %c0_i32_1 = arith.constant 0 : i32
    return %arg0, %arg1, %c0_i32, %c0_i32_0 : i32, i32, i32, i32
  }
}

</mosaic_0001>

<llo_original>
// kernel: tpu_custom_call.1
$region0: #{tpu_custom_call.1}
  #allocation0 [shape = 'u32[]', space=smem, size = 0x4, offset = 0x4, fixed_abs, tag = 'smem constant byte address 0x4 - core index']
  #allocation1 [shape = 'u32[72,128]{1,0:T(1,128)}', space=vmem, size = 0x9000, scoped, tag = 'internal scratch']
  %s0 = inlined_call_operand.hbm [shape: f32[2,8,256], index: 0, kind: input, shape index: {}]
  %s1 = inlined_call_operand.hbm [shape: s32[2,1,256], index: 1, kind: input, shape index: {}]
  %s2 = inlined_call_operand.hbm [shape: f32[2,1,8,128], index: 2, kind: output, shape index: {}]
  %s3 = sld [smem:[#allocation0]]
  $region49: #{tpu_custom_call.1} parent=0
    _
  %s5 = ssub.s32 1, %s3
  %s6 = scalar_select 0, %s5, %s3
  $region1: #{tpu_custom_call.1} parent=0
    #allocation2 [shape = 'u8[16384]{0}', space=vmem, size = 0x4000, scoped, tag = 'input window, operand 0']
    #allocation3 [shape = 's32[2]{0}', space=sflag, size = 0x8, scoped, tag = 'scoped memory for tpu_custom_call.1']
    #allocation4 [shape = 's32[2]{0}', space=sflag, size = 0x8, scoped, tag = 'scoped memory for tpu_custom_call.1']
    #allocation5 [shape = 'u8[2048]{0}', space=vmem, size = 0x800, scoped, tag = 'input window, operand 1']
    #allocation6 [shape = 's32[2]{0}', space=sflag, size = 0x8, scoped, tag = 'scoped memory for tpu_custom_call.1']
    #allocation7 [shape = 'u8[8192]{0}', space=vmem, size = 0x2000, scoped, tag = 'output window, operand 0']
    %7 = vsyncpa [#allocation3], 0
    %s8 = scalar_lea.sflag [#allocation3], 1
    %9 = vsyncpa %s8, 0
    %10 = vsyncpa [#allocation6], 0
    %s11 = scalar_lea.sflag [#allocation6], 1
    %12 = vsyncpa %s11, 0
    %13 = vsyncpa [#allocation4], 0
    %s14 = scalar_lea.sflag [#allocation4], 1
    %15 = vsyncpa %s14, 0
    loop: start=0, step=1, limit=4
    $region2: #{tpu_custom_call.1} parent=1 // loop_pre_header
      _
    $region3: #{tpu_custom_call.1} parent=1 // loop_header
      %s17 = sphi 0, %s21
      %p18 = scmp.ge.s32.totalorder %s17, 4
      %s24 = sphi 0, %s36
      %s25 = sphi 0, %s32
      %s26 = sphi 0, %s24
      %s27 = sphi 0, %s25
      %s28 = sphi 0, %s26
      %s29 = sphi 0, %s27
      %s41 = sphi 0, %s43
      %s44 = sphi 0, %s41
      %s45 = sphi 0, %s44
      %s61 = sphi 0, %s45
      %s69 = sphi 0, %s71
      %s72 = sphi 0, %s69
      %s73 = sphi 0, %s72
      %s89 = sphi 0, %s73
      %s97 = sphi 0, %s99
      %s100 = sphi 0, %s97
      %s101 = sphi 0, %s100
      %s117 = sphi 0, %s101
    $region4: #{tpu_custom_call.1} parent=1 // loop_header_branch
      %20 = sbr.rel (%p18) target = $region8
    $region5: #{tpu_custom_call.1} parent=1 // loop_body
      %s22 = ssub.s32 %s17, 1
      %s23 = ssub.s32 %s17, 2
      %s30 = sadd.s32 1, %s25
      %p31 = scmp.ge.s32.totalorder %s30, 1
      %s32 = scalar_select %p31, 0, %s30
      %s33 = sadd.s32 1, %s24
      %s34 = scalar_select %p31, %s33, %s24
      %p35 = scmp.ge.s32.totalorder %s34, 2
      %s36 = scalar_select %p35, 0, %s34
      %s37 = ssub.s32 %s24, %s36
      %s38 = ssub.s32 %s25, %s32
      %s39 = sor.u32 %s37, %s38
      %p40 = scmp.eq.s32.totalorder %s39, 0
      %s42 = sadd.s32 %s41, 1
      %s43 = scalar_select %p40, %s41, %s42
      %p46 = pneg %p40
      %p47 = scmp.eq.s32.totalorder %s17, 1
      %p48 = por %p46, %p47
      %p49 = scmp.ne.s32.totalorder %s41, %s44
      %p50 = scmp.eq.s32.totalorder %s17, 0
      %p51 = por %p49, %p50
      %p52 = scmp.ne.s32.totalorder %s41, %s44
      %p53 = scmp.eq.s32.totalorder %s22, 1
      %p54 = por %p52, %p53
      %p55 = scmp.ne.s32.totalorder %s44, %s45
      %p56 = scmp.eq.s32.totalorder %s22, 0
      %p57 = por %p55, %p56
      %p58 = scmp.ne.s32.totalorder %s44, %s45
      %p59 = scmp.eq.s32.totalorder %s23, 1
      %p60 = por %p58, %p59
      %p62 = scmp.ne.s32.totalorder %s45, %s61
      %p63 = scmp.eq.s32.totalorder %s23, 0
      %p64 = por %p62, %p63
      %s65 = ssub.s32 %s24, %s36
      %s66 = ssub.s32 %s25, %s32
      %s67 = sor.u32 %s65, %s66
      %p68 = scmp.eq.s32.totalorder %s67, 0
      %s70 = sadd.s32 %s69, 1
      %s71 = scalar_select %p68, %s69, %s70
      %p74 = pneg %p68
      %p75 = scmp.eq.s32.totalorder %s17, 1
      %p76 = por %p74, %p75
      %p77 = scmp.ne.s32.totalorder %s69, %s72
      %p78 = scmp.eq.s32.totalorder %s17, 0
      %p79 = por %p77, %p78
      %p80 = scmp.ne.s32.totalorder %s69, %s72
      %p81 = scmp.eq.s32.totalorder %s22, 1
      %p82 = por %p80, %p81
      %p83 = scmp.ne.s32.totalorder %s72, %s73
      %p84 = scmp.eq.s32.totalorder %s22, 0
      %p85 = por %p83, %p84
      %p86 = scmp.ne.s32.totalorder %s72, %s73
      %p87 = scmp.eq.s32.totalorder %s23, 1
      %p88 = por %p86, %p87
      %p90 = scmp.ne.s32.totalorder %s73, %s89
      %p91 = scmp.eq.s32.totalorder %s23, 0
      %p92 = por %p90, %p91
      %s93 = ssub.s32 %s24, %s36
      %s94 = ssub.s32 %s25, %s32
      %s95 = sor.u32 %s93, %s94
      %p96 = scmp.eq.s32.totalorder %s95, 0
      %s98 = sadd.s32 %s97, 1
      %s99 = scalar_select %p96, %s97, %s98
      %p102 = pneg %p96
      %p103 = scmp.eq.s32.totalorder %s17, 1
      %p104 = por %p102, %p103
      %p105 = scmp.ne.s32.totalorder %s97, %s100
      %p106 = scmp.eq.s32.totalorder %s17, 0
      %p107 = por %p105, %p106
      %p108 = scmp.ne.s32.totalorder %s97, %s100
      %p109 = scmp.eq.s32.totalorder %s22, 1
      %p110 = por %p108, %p109
      %p111 = scmp.ne.s32.totalorder %s100, %s101
      %p112 = scmp.eq.s32.totalorder %s22, 0
      %p113 = por %p111, %p112
      %p114 = scmp.ne.s32.totalorder %s100, %s101
      %p115 = scmp.eq.s32.totalorder %s23, 1
      %p116 = por %p114, %p115
      %p118 = scmp.ne.s32.totalorder %s101, %s117
      %p119 = scmp.eq.s32.totalorder %s23, 0
      %p120 = por %p118, %p119
      %p121 = scmp.le.s32.totalorder 1, %s17
      %p122 = scmp.lt.s32.totalorder %s17, 3
      %p123 = pnand %p121, %p122
      %p124 = pneg %p123
      // Predicated region
      $region9: #{tpu_custom_call.1} parent=5 // pred_check
        _
      $region10: #{tpu_custom_call.1} parent=5 // pred_check_branch
        %126 = sbr.rel (%p123) target = $region12
      $region11: #{tpu_custom_call.1} parent=5 // pred_region
        %s127 = ssub.s32 %s17, 1
      $region12: #{tpu_custom_call.1} parent=5 // pred_fallthru
        _
      %p128 = scmp.lt.s32.totalorder %s17, 2
      // Predicated region
      $region13: #{tpu_custom_call.1} parent=5 // pred_check
        %p129 = pneg %p128
      $region14: #{tpu_custom_call.1} parent=5 // pred_check_branch
        %131 = sbr.rel (%p129) target = $region16
      $region15: #{tpu_custom_call.1} parent=5 // pred_region
        // Predicated region
        $region17: #{tpu_custom_call.1} parent=15 // pred_check
          %p132 = pneg %p51
        $region18: #{tpu_custom_call.1} parent=15 // pred_check_branch
          %134 = sbr.rel (%p132) target = $region20
        $region19: #{tpu_custom_call.1} parent=15 // pred_region
          %s135 = sand.u32 %s41, 1
          %s136 = scalar_lea.sflag [#allocation3], %s135
          %s137 = sand.u32 %s41, 1
          %s138 = smul.addr %s137, 16
          %s139 = scalar_lea.vmem [#allocation2], %s138
          %s140 = smul.u32 2, %s25
          %142 = vsyncadd %s136, 0
          %s143 = smul.addr %s24, 2
          %s144 = sadd.s32 %s140, %s143
          %s145 = smul.addr %s144, 8
          %s146 = scalar_lea.hbm %s0, %s145
          %s148 = sshll.u32 %s146, 4
          %s149 = int_to_ptr.hbm [resolvable:$true] %s148
          %s150 = sshll.u32 %s139, 4
          %s151 = int_to_ptr.vmem [resolvable:$true] %s150
          %153 = dma.hbm_to_vmem [thread:$0]  %s149, 256, %s151, %s136
        $region20: #{tpu_custom_call.1} parent=15 // pred_fallthru
          _
        // Predicated region
        $region21: #{tpu_custom_call.1} parent=15 // pred_check
          %p154 = pneg %p79
        $region22: #{tpu_custom_call.1} parent=15 // pred_check_branch
          %156 = sbr.rel (%p154) target = $region24
        $region23: #{tpu_custom_call.1} parent=15 // pred_region
          %s157 = sand.u32 %s69, 1
          %s158 = scalar_lea.sflag [#allocation6], %s157
          %s159 = sand.u32 %s69, 1
          %s160 = smul.addr %s159, 2
          %s161 = scalar_lea.vmem [#allocation5], %s160
          %s162 = smul.u32 2, %s25
          %164 = vsyncadd %s158, 0
          %s165 = smul.addr %s24, 2
          %s166 = sadd.s32 %s162, %s165
          %s167 = scalar_lea.hbm %s1, %s166
          %s169 = sshll.u32 %s167, 4
          %s170 = int_to_ptr.hbm [resolvable:$true] %s169
          %s171 = sshll.u32 %s161, 4
          %s172 = int_to_ptr.vmem [resolvable:$true] %s171
          %174 = dma.hbm_to_vmem [thread:$0]  %s170, 32, %s172, %s158
        $region24: #{tpu_custom_call.1} parent=15 // pred_fallthru
          _
      $region16: #{tpu_custom_call.1} parent=5 // pred_fallthru
        _
      %p175 = scmp.le.s32.totalorder 1, %s17
      %p176 = scmp.lt.s32.totalorder %s17, 3
      %p177 = pnand %p175, %p176
      %p178 = pneg %p177
      // Predicated region
      $region25: #{tpu_custom_call.1} parent=5 // pred_check
        _
      $region26: #{tpu_custom_call.1} parent=5 // pred_check_branch
        %180 = sbr.rel (%p177) target = $region28
      $region27: #{tpu_custom_call.1} parent=5 // pred_region
        %s181 = ssub.s32 %s17, 1
        %s182 = sand.u32 %s44, 1
        %s183 = scalar_lea.sflag [#allocation3], %s182
        %s184 = sand.u32 %s44, 1
        %s185 = smul.addr %s184, 16
        %s186 = scalar_lea.vmem [#allocation2], %s185
        // Predicated region
        $region29: #{tpu_custom_call.1} parent=27 // pred_check
          %p187 = pneg %p57
        $region30: #{tpu_custom_call.1} parent=27 // pred_check_branch
          %189 = sbr.rel (%p187) target = $region32
        $region31: #{tpu_custom_call.1} parent=27 // pred_region
          %191 = dma.done %s183, 256
        $region32: #{tpu_custom_call.1} parent=27 // pred_fallthru
          _
        %s192 = sand.u32 %s72, 1
        %s193 = scalar_lea.sflag [#allocation6], %s192
        %s194 = sand.u32 %s72, 1
        %s195 = smul.addr %s194, 2
        %s196 = scalar_lea.vmem [#allocation5], %s195
        // Predicated region
        $region33: #{tpu_custom_call.1} parent=27 // pred_check
          %p197 = pneg %p85
        $region34: #{tpu_custom_call.1} parent=27 // pred_check_branch
          %199 = sbr.rel (%p197) target = $region36
        $region35: #{tpu_custom_call.1} parent=27 // pred_region
          %201 = dma.done %s193, 32
        $region36: #{tpu_custom_call.1} parent=27 // pred_fallthru
          _
        %s202 = sand.u32 %s44, 1
        %s203 = scalar_lea.sflag [#allocation3], %s202
        %s204 = sand.u32 %s44, 1
        %s205 = smul.addr %s204, 16
        %s206 = scalar_lea.vmem [#allocation2], %s205
        %p207 = pneg %p57
        %p208 = pneg %p54
        %s209 = sand.u32 %s72, 1
        %s210 = scalar_lea.sflag [#allocation6], %s209
        %s211 = sand.u32 %s72, 1
        %s212 = smul.addr %s211, 2
        %s213 = scalar_lea.vmem [#allocation5], %s212
        %p214 = pneg %p85
        %p215 = pneg %p82
        %p216 = pneg %p113
        %p217 = pneg %p110
        %s218 = sand.u32 %s100, 1
        %s219 = scalar_lea.sflag [#allocation4], %s218
        %s220 = sand.u32 %s100, 1
        %s221 = smul.addr %s220, 8
        %s222 = scalar_lea.vmem [#allocation7], %s221
        %s223 = smul.u32 2, %s27
        %s224 = smul.u32 2, %s27
        %v225 = vld [vmem:[%s186] sm:$0xff]
        %v226 = vld [vmem:[%s186 + $0x8] sm:$0xff]
        %v227 = vld [vmem:[%s196] sm:$0x3]
        %v228 = vlaneseq
        %v229 = vand.u32 %v228, 127
        %v230 = vadd.s32 %v229, 128
        %s231 = smul.u32 %s27, 256
        %v232 = vstv %s231
        %v233 = vadd.s32 %v232, %v229
        %v234 = vadd.s32 %v232, %v230
        %vm235 = vcmp.lt.s32.totalorder %v233, 256
        %vm236 = vcmp.lt.s32.totalorder %v234, 256
        %v237 = vrot.slane %v225, 4
        %v238 = vmax.f32 %v225, %v237
        %v239 = vrot.slane %v238, 2
        %v240 = vmax.f32 %v238, %v239
        %v241 = vrot.slane %v240, 1
        %v242 = vmax.f32 %v240, %v241
        %v243 = vrot.slane %v226, 4
        %v244 = vmax.f32 %v226, %v243
        %v245 = vrot.slane %v244, 2
        %v246 = vmax.f32 %v244, %v245
        %v247 = vrot.slane %v246, 1
        %v248 = vmax.f32 %v246, %v247
        %v249 = vsub.f32 %v225, %v242
        %v250 = vsub.f32 %v226, %v248
        %v251 = vmul.f32 %v249, 1.442695
        %v252 = vpow.pop %v251
        %v253 = vmul.f32 %v250, 1.442695
        %v254 = vpow.pop %v253
        %v255 = vrot.slane %v252, 4
        %v256 = vadd.f32 %v252, %v255
        %v257 = vrot.slane %v256, 2
        %v258 = vadd.f32 %v256, %v257
        %v259 = vrot.slane %v258, 1
        %v260 = vadd.f32 %v258, %v259
        %v261 = vrot.slane %v254, 4
        %v262 = vadd.f32 %v254, %v261
        %v263 = vrot.slane %v262, 2
        %v264 = vadd.f32 %v262, %v263
        %v265 = vrot.slane %v264, 1
        %v266 = vadd.f32 %v264, %v265
        %v267 = vlog2.pop %v260
        %v268 = vmul.f32 %v267, 0.6931472
        %v269 = vlog2.pop %v266
        %v270 = vmul.f32 %v269, 0.6931472
        %v271 = vlaneseq
        %v272 = vshrl.u32 %v271, 7
        %v273 = vperm.slane %v227, 0
        %v274 = vperm.slane %v227, 1
        %vm275 = vcmp.eq.s32.totalorder %v272, %v273
        %vm276 = vcmp.eq.s32.totalorder %v272, %v274
        %v277 = vsel %vm275, %v249, 0.0
        %v278 = vsel %vm276, %v250, 0.0
        %v279 = vrot.slane %v277, 4
        %v280 = vadd.f32 %v277, %v279
        %v281 = vrot.slane %v280, 2
        %v282 = vadd.f32 %v280, %v281
        %v283 = vrot.slane %v282, 1
        %v284 = vadd.f32 %v282, %v283
        %v285 = vrot.slane %v278, 4
        %v286 = vadd.f32 %v278, %v285
        %v287 = vrot.slane %v286, 2
        %v288 = vadd.f32 %v286, %v287
        %v289 = vrot.slane %v288, 1
        %v290 = vadd.f32 %v288, %v289
        %v291 = vsub.f32 %v268, %v284
        %v292 = vsub.f32 %v270, %v290
        %v293 = vsub.f32 0.0, %v291
        %v294 = vsub.f32 0.0, %v292
        %v295 = vmul.f32 %v293, 1.442695
        %v296 = vpow.pop %v295
        %v297 = vmul.f32 %v294, 1.442695
        %v298 = vpow.pop %v297
        %v299 = vsel %vm235, 1.0, 0.0
        %v300 = vsel %vm236, 1.0, 0.0
        %v301 = vsub.f32 1.0, %v296
        %v302 = vsub.f32 1.0, %v298
        %v303 = vmul.f32 %v301, %v301
        %v304 = vmul.f32 %v302, %v302
        %v305 = vmul.f32 %v299, %v303
        %v306 = vmul.f32 %v300, %v304
        %v307 = vmul.f32 %v305, %v291
        %v308 = vmul.f32 %v306, %v292
        %v309 = vsel %vm235, %v307, 0.0
        %v310 = vsel %vm236, %v308, 0.0
        %vm311 = vcmask 1040384
        %v312 = vsel %vm311, %v309, 0.0
        %v313 = vsel %vm311, %v310, 0.0
        %v314 = vadd.f32 %v312, %v313
        %315 = vadd.xlane.f32.xlu0 %v314
        %v316 = vpop.xlane.xlu0 %315
        %v317 = vrot.slane %v316, 4
        %v318 = vadd.f32 %v316, %v317
        %v319 = vrot.slane %v318, 2
        %v320 = vadd.f32 %v318, %v319
        %v321 = vrot.slane %v320, 1
        %v322 = vadd.f32 %v320, %v321
        %s323 = vtos %v322
        %v324 = vstv %s323
        %325 = vst [vmem:[%s222] sm:$0xff] %v324
        %s326 = sand.u32 %s100, 1
        %s327 = scalar_lea.sflag [#allocation4], %s326
        %s328 = sand.u32 %s100, 1
        %s329 = smul.addr %s328, 8
        %s330 = scalar_lea.vmem [#allocation7], %s329
        // Predicated region
        $region37: #{tpu_custom_call.1} parent=27 // pred_check
          %p331 = pneg %p110
        $region38: #{tpu_custom_call.1} parent=27 // pred_check_branch
          %333 = sbr.rel (%p331) target = $region40
        $region39: #{tpu_custom_call.1} parent=27 // pred_region
          %335 = vsyncadd %s327, 0
          %s336 = sadd.s32 %s27, %s26
          %s337 = smul.addr %s336, 8
          %s338 = scalar_lea.hbm %s2, %s337
          %s340 = sshll.u32 %s330, 4
          %s341 = int_to_ptr.vmem [resolvable:$true] %s340
          %s342 = sshll.u32 %s338, 4
          %s343 = int_to_ptr.hbm [resolvable:$true] %s342
          %345 = dma.vmem_to_hbm [thread:$0]  %s341, 128, %s343, %s327
        $region40: #{tpu_custom_call.1} parent=27 // pred_fallthru
          _
      $region28: #{tpu_custom_call.1} parent=5 // pred_fallthru
        _
      %p346 = scmp.le.s32.totalorder 2, %s17
      // Predicated region
      $region41: #{tpu_custom_call.1} parent=5 // pred_check
        %p347 = pneg %p346
      $region42: #{tpu_custom_call.1} parent=5 // pred_check_branch
        %349 = sbr.rel (%p347) target = $region44
      $region43: #{tpu_custom_call.1} parent=5 // pred_region
        %s350 = ssub.s32 %s17, 2
        // Predicated region
        $region45: #{tpu_custom_call.1} parent=43 // pred_check
          %p351 = pneg %p116
        $region46: #{tpu_custom_call.1} parent=43 // pred_check_branch
          %353 = sbr.rel (%p351) target = $region48
        $region47: #{tpu_custom_call.1} parent=43 // pred_region
          %s354 = sand.u32 %s101, 1
          %s355 = scalar_lea.sflag [#allocation4], %s354
          %s356 = sand.u32 %s101, 1
          %s357 = smul.addr %s356, 8
          %s358 = scalar_lea.vmem [#allocation7], %s357
          %360 = dma.done %s355, 128
        $region48: #{tpu_custom_call.1} parent=43 // pred_fallthru
          _
      $region44: #{tpu_custom_call.1} parent=5 // pred_fallthru
        _
    $region6: #{tpu_custom_call.1} parent=1 // loop_footer
      %s21 = sadd.s32 1, %s17
    $region7: #{tpu_custom_call.1} parent=1 // loop_footer_branch
      %16 = sbr.rel target = $region3
    $region8: #{tpu_custom_call.1} parent=1 // loop_exit
      _
    %361 = vsyncpa [#allocation3], 1
    %s362 = scalar_lea.sflag [#allocation3], 1
    %363 = vsyncpa %s362, 1
    %364 = vsyncpa [#allocation6], 1
    %s365 = scalar_lea.sflag [#allocation6], 1
    %366 = vsyncpa %s365, 1
    %367 = vsyncpa [#allocation4], 1
    %s368 = scalar_lea.sflag [#allocation4], 1
    %369 = vsyncpa %s368, 1

</llo_original>
